<compile_context>
chip_gen: v7x
topology: tpu7x:2x2x1
jax: 0.10.0
libtpu: 0.0.40
codegen_flags: <defaults>
</compile_context>

<pallas_src>
import functools

import jax
import jax.numpy as jnp
from jax.experimental import pallas as pl
from jax.experimental.pallas import tpu as pltpu


def _graphsage_fused_kernel(countst_ref, deg_ref, x_ref, w1l_ref, w1r_ref,
                            b1_ref, w2_ref, b2_ref, out_ref, *, f_out):
    """Fused 2-layer GraphSAGE forward, node axis on lanes.

    countst_ref: [N, N]   bf16, counts^T (counts^T[s, d] = #edges s->d), unnormalized
    deg_ref:     [1, N]   f32, in-degree per destination node
    x_ref:       [N, Fin] f32, node features (natural layout)
    w1l_ref/w1r_ref: [Fhid, Fin] bf16
    b1_ref:      [Fhid, 1] f32
    w2_ref:      [2*Fout, Fhid] bf16  ([W2_l ; W2_r] stacked)
    b2_ref:      [Fout, 1] f32
    out_ref:     [N, Fout] f32
    """
    adjt = countst_ref[...]                                                   # [N, N] bf16
    inv_deg = 1.0 / jnp.maximum(deg_ref[...], 1.0)                            # [1, N] f32

    xt = x_ref[...].T.astype(jnp.bfloat16)                                    # [Fin, N]

    # ---- layer 1: h^T = relu(W1_l @ (x^T @ counts^T) * inv_deg + W1_r @ x^T + b1) ----
    agg1t = jnp.dot(xt, adjt, preferred_element_type=jnp.float32) * inv_deg   # [Fin, N] f32
    ht = (jnp.dot(w1l_ref[...], agg1t.astype(jnp.bfloat16),
                  preferred_element_type=jnp.float32)
          + jnp.dot(w1r_ref[...], xt, preferred_element_type=jnp.float32))    # [Fhid, N]
    ht = jnp.maximum(ht + b1_ref[...], 0.0)                                   # f32 relu

    # dropout(p=0.2, training=False) -> identity (eval mode).

    # ---- layer 2 (reordered): out^T = (W2_l @ h^T) @ counts^T * inv_deg + W2_r @ h^T + b2 ----
    t = jnp.dot(w2_ref[...], ht.astype(jnp.bfloat16),
                preferred_element_type=jnp.float32)                           # [2Fout, N]
    t_l = t[:f_out, :].astype(jnp.bfloat16)                                   # [Fout, N]
    t_r = t[f_out:, :]                                                        # [Fout, N] f32
    outt = (jnp.dot(t_l, adjt, preferred_element_type=jnp.float32) * inv_deg
            + t_r + b2_ref[...])                                              # [Fout, N]
    out_ref[...] = outt.T.astype(out_ref.dtype)                               # [N, Fout]


def graphsage_forward(x, edge_index, params):
    n, f_in = x.shape
    f_hid = params["w1_l"].shape[0]
    f_out = params["w2_l"].shape[0]

    # Pad the node (lane) axis to a multiple of 128 so every tile is lane-dense.
    n_pad = ((n + 127) // 128) * 128
    if n_pad != n:
        x = jnp.pad(x, ((0, n_pad - n), (0, 0)))
    x = x.astype(jnp.float32)

    src = edge_index[0]
    dst = edge_index[1]
    # O(E) adjacency build: raw edge counts (exact small integers -> bf16 is lossless)
    # and in-degree row. Normalization (1/deg) is folded into the kernel.
    counts_t = (jnp.zeros((n_pad, n_pad), jnp.float32)
                .at[src, dst].add(1.0)
                .astype(jnp.bfloat16))                                        # [N, N]
    deg = jnp.zeros((1, n_pad), jnp.float32).at[0, dst].add(1.0)              # [1, N]

    w1l = params["w1_l"].astype(jnp.bfloat16)                                 # [Fhid, Fin]
    w1r = params["w1_r"].astype(jnp.bfloat16)                                 # [Fhid, Fin]
    b1 = params["b1"].reshape(f_hid, 1).astype(jnp.float32)
    w2 = jnp.concatenate([params["w2_l"], params["w2_r"]], axis=0).astype(jnp.bfloat16)
    b2 = params["b2"].reshape(f_out, 1).astype(jnp.float32)

    operands = (counts_t, deg, x, w1l, w1r, b1, w2, b2)

    # VMEM budget from the actual footprint, capped at ~0.75x this chip's capacity.
    out_bytes = n_pad * f_out * 4
    footprint = sum(int(a.size) * a.dtype.itemsize for a in operands) + out_bytes
    try:
        info = pltpu.get_tpu_info()
        vmem_cap = int(getattr(info, "vmem_capacity_bytes", 0)) or (64 << 20)
    except Exception:
        vmem_cap = 64 << 20  # conservative fallback (v7x per-TC VMEM)
    vmem_limit = int(min(max(4 * footprint, 16 << 20), int(0.75 * vmem_cap)))

    kernel = functools.partial(_graphsage_fused_kernel, f_out=f_out)
    vmem_spec = lambda: pl.BlockSpec(memory_space=pltpu.MemorySpace.VMEM)

    out_pad = pl.pallas_call(
        kernel,
        out_shape=jax.ShapeDtypeStruct((n_pad, f_out), jnp.float32),
        in_specs=[vmem_spec() for _ in operands],
        out_specs=vmem_spec(),
        compiler_params=pltpu.CompilerParams(vmem_limit_bytes=vmem_limit),
    )(*operands)

    return out_pad[:n]


def init_params(key, in_channels, hidden_channels, out_channels):
    k = jax.random.split(key, 6)
    s1 = 1.0 / jnp.sqrt(jnp.float32(in_channels))
    s2 = 1.0 / jnp.sqrt(jnp.float32(hidden_channels))
    return {
        # PyTorch nn.Linear layout: [Fout, Fin]; bias: [Fout].
        "w1_l": jax.random.uniform(k[0], (hidden_channels, in_channels), jnp.float32, -s1, s1),
        "w1_r": jax.random.uniform(k[1], (hidden_channels, in_channels), jnp.float32, -s1, s1),
        "b1": jax.random.uniform(k[2], (hidden_channels,), jnp.float32, -s1, s1),
        "w2_l": jax.random.uniform(k[3], (out_channels, hidden_channels), jnp.float32, -s2, s2),
        "w2_r": jax.random.uniform(k[4], (out_channels, hidden_channels), jnp.float32, -s2, s2),
        "b2": jax.random.uniform(k[5], (out_channels,), jnp.float32, -s2, s2),
    }


if __name__ == "__main__":
    N = 128           # nodes (lane axis)
    E = 512           # edges
    IN_C, HID_C, OUT_C = 16, 32, 8

    root = jax.random.PRNGKey(0)
    k_x, k_e, k_p = jax.random.split(root, 3)

    x = jax.random.normal(k_x, (N, IN_C), jnp.float32)
    edge_index = jax.random.randint(k_e, (2, E), 0, N, jnp.int32)
    params = init_params(k_p, IN_C, HID_C, OUT_C)

    out = jax.jit(graphsage_forward)(x, edge_index, params)
    out = jax.block_until_ready(out)

    # Pure-JAX f32 reference of the spec math (standard [N, F] layout, unreordered).
    src, dst = edge_index
    counts = jnp.zeros((N, N), jnp.float32).at[dst, src].add(1.0)     # counts[d, s]
    adj = counts / jnp.maximum(counts.sum(axis=1, keepdims=True), 1.0)
    h_ref = jnp.maximum(
        adj @ x @ params["w1_l"].T + x @ params["w1_r"].T + params["b1"], 0.0
    )
    ref = adj @ h_ref @ params["w2_l"].T + h_ref @ params["w2_r"].T + params["b2"]

    assert out.shape == (N, OUT_C)
    err = float(jnp.max(jnp.abs(out - ref)))
    # Tolerance covers bf16 MXU inputs (f32 accumulation) + matmul reassociation.
    assert jnp.allclose(out, ref, atol=5e-2, rtol=5e-2), err

    print("KERNEL_OK")
</pallas_src>

<mosaic_0001>
module attributes {stable_mosaic.version = 11 : i64} {
  func.func private @main(%arg0: i32) attributes {dimension_semantics = [#tpu.dimension_semantics<core_parallel>], iteration_bounds = array<i64: 2>, tpu.core_type = #tpu.core_type<sc_scalar_subcore>, window_params = []} {
    return
  }
}

module attributes {stable_mosaic.version = 11 : i64} {
  func.func private @main(%arg0: i32) attributes {dimension_semantics = [#tpu.dimension_semantics<core_parallel>], iteration_bounds = array<i64: 2>, tpu.core_type = #tpu.core_type<sc_scalar_subcore>, window_params = []} {
    return
  }
}

module attributes {stable_mosaic.version = 11 : i64} {
  func.func @_graphsage_fused_kernel(%arg0: memref<128x128xbf16, #tpu.memory_space<vmem>>, %arg1: memref<1x128xf32, #tpu.memory_space<vmem>>, %arg2: memref<128x16xf32, #tpu.memory_space<vmem>>, %arg3: memref<32x16xbf16, #tpu.memory_space<vmem>>, %arg4: memref<32x16xbf16, #tpu.memory_space<vmem>>, %arg5: memref<32x1xf32, #tpu.memory_space<vmem>>, %arg6: memref<16x32xbf16, #tpu.memory_space<vmem>>, %arg7: memref<8x1xf32, #tpu.memory_space<vmem>>, %arg8: memref<128x8xf32, #tpu.memory_space<vmem>>) attributes {dimension_semantics = [], scalar_prefetch = 0 : i64, scratch_operands = 0 : i64, tpu.core_type = #tpu.core_type<tc>} {
    %c0 = arith.constant 0 : index
    %c0_0 = arith.constant 0 : index
    %0 = vector.load %arg0[%c0, %c0_0] : memref<128x128xbf16, #tpu.memory_space<vmem>>, vector<128x128xbf16>
    %c0_1 = arith.constant 0 : index
    %c0_2 = arith.constant 0 : index
    %1 = vector.load %arg1[%c0_1, %c0_2] : memref<1x128xf32, #tpu.memory_space<vmem>>, vector<1x128xf32>
    %cst = arith.constant 1.000000e+00 : f32
    %2 = vector.broadcast %cst : f32 to vector<1x128xf32>
    %3 = arith.maximumf %1, %2 : vector<1x128xf32>
    %cst_3 = arith.constant 1.000000e+00 : f32
    %4 = vector.broadcast %cst_3 : f32 to vector<1x128xf32>
    %5 = arith.divf %4, %3 : vector<1x128xf32>
    %c0_4 = arith.constant 0 : index
    %c0_5 = arith.constant 0 : index
    %6 = vector.load %arg2[%c0_4, %c0_5] : memref<128x16xf32, #tpu.memory_space<vmem>>, vector<128x16xf32>
    %7 = tpu.transpose %6, [1, 0] : vector<128x16xf32> -> vector<16x128xf32>
    %8 = arith.truncf %7 : vector<16x128xf32> to vector<16x128xbf16>
    %cst_6 = arith.constant dense<0.000000e+00> : vector<16x128xf32>
    %9 = tpu.matmul %8, %0, %cst_6 {dimension_numbers = #tpu.dot_dimension_numbers<[1], [0], [0], [1], [0, 0, 1, 1], [], []>} : vector<16x128xbf16>, vector<128x128xbf16>, vector<16x128xf32> -> vector<16x128xf32>
    %10 = vector.broadcast %5 : vector<1x128xf32> to vector<16x128xf32>
    %11 = arith.mulf %9, %10 : vector<16x128xf32>
    %c0_7 = arith.constant 0 : index
    %c0_8 = arith.constant 0 : index
    %12 = vector.load %arg3[%c0_7, %c0_8] : memref<32x16xbf16, #tpu.memory_space<vmem>>, vector<32x16xbf16>
    %13 = arith.truncf %11 : vector<16x128xf32> to vector<16x128xbf16>
    %cst_9 = arith.constant dense<0.000000e+00> : vector<32x128xf32>
    %14 = tpu.matmul %12, %13, %cst_9 {dimension_numbers = #tpu.dot_dimension_numbers<[1], [0], [0], [1], [0, 0, 1, 1], [], []>} : vector<32x16xbf16>, vector<16x128xbf16>, vector<32x128xf32> -> vector<32x128xf32>
    %c0_10 = arith.constant 0 : index
    %c0_11 = arith.constant 0 : index
    %15 = vector.load %arg4[%c0_10, %c0_11] : memref<32x16xbf16, #tpu.memory_space<vmem>>, vector<32x16xbf16>
    %cst_12 = arith.constant dense<0.000000e+00> : vector<32x128xf32>
    %16 = tpu.matmul %15, %8, %cst_12 {dimension_numbers = #tpu.dot_dimension_numbers<[1], [0], [0], [1], [0, 0, 1, 1], [], []>} : vector<32x16xbf16>, vector<16x128xbf16>, vector<32x128xf32> -> vector<32x128xf32>
    %17 = arith.addf %14, %16 : vector<32x128xf32>
    %c0_13 = arith.constant 0 : index
    %c0_14 = arith.constant 0 : index
    %18 = vector.load %arg5[%c0_13, %c0_14] : memref<32x1xf32, #tpu.memory_space<vmem>>, vector<32x1xf32>
    %19 = vector.broadcast %18 : vector<32x1xf32> to vector<32x128xf32>
    %20 = arith.addf %17, %19 : vector<32x128xf32>
    %cst_15 = arith.constant 0.000000e+00 : f32
    %21 = vector.broadcast %cst_15 : f32 to vector<32x128xf32>
    %22 = arith.maximumf %20, %21 : vector<32x128xf32>
    %c0_16 = arith.constant 0 : index
    %c0_17 = arith.constant 0 : index
    %23 = vector.load %arg6[%c0_16, %c0_17] : memref<16x32xbf16, #tpu.memory_space<vmem>>, vector<16x32xbf16>
    %24 = arith.truncf %22 : vector<32x128xf32> to vector<32x128xbf16>
    %cst_18 = arith.constant dense<0.000000e+00> : vector<16x128xf32>
    %25 = tpu.matmul %23, %24, %cst_18 {dimension_numbers = #tpu.dot_dimension_numbers<[1], [0], [0], [1], [0, 0, 1, 1], [], []>} : vector<16x32xbf16>, vector<32x128xbf16>, vector<16x128xf32> -> vector<16x128xf32>
    %26 = vector.extract_strided_slice %25 {offsets = [0, 0], sizes = [8, 128], strides = [1, 1]} : vector<16x128xf32> to vector<8x128xf32>
    %27 = arith.truncf %26 : vector<8x128xf32> to vector<8x128xbf16>
    %28 = vector.extract_strided_slice %25 {offsets = [8, 0], sizes = [8, 128], strides = [1, 1]} : vector<16x128xf32> to vector<8x128xf32>
    %cst_19 = arith.constant dense<0.000000e+00> : vector<8x128xf32>
    %29 = tpu.matmul %27, %0, %cst_19 {dimension_numbers = #tpu.dot_dimension_numbers<[1], [0], [0], [1], [0, 0, 1, 1], [], []>} : vector<8x128xbf16>, vector<128x128xbf16>, vector<8x128xf32> -> vector<8x128xf32>
    %30 = vector.broadcast %5 : vector<1x128xf32> to vector<8x128xf32>
    %31 = arith.mulf %29, %30 : vector<8x128xf32>
    %32 = arith.addf %31, %28 : vector<8x128xf32>
    %c0_20 = arith.constant 0 : index
    %c0_21 = arith.constant 0 : index
    %33 = vector.load %arg7[%c0_20, %c0_21] : memref<8x1xf32, #tpu.memory_space<vmem>>, vector<8x1xf32>
    %34 = vector.broadcast %33 : vector<8x1xf32> to vector<8x128xf32>
    %35 = arith.addf %32, %34 : vector<8x128xf32>
    %36 = tpu.transpose %35, [1, 0] : vector<8x128xf32> -> vector<128x8xf32>
    %c0_22 = arith.constant 0 : index
    %c0_23 = arith.constant 0 : index
    %37 = vector.load %arg8[%c0_22, %c0_23] : memref<128x8xf32, #tpu.memory_space<vmem>>, vector<128x8xf32>
    tpu.vector_store %arg8[%c0_22, %c0_23], %36 {strides = array<i32>} : memref<128x8xf32, #tpu.memory_space<vmem>>, vector<128x8xf32>,
    return
  }
}

</mosaic_0001>

<llo_original>
// kernel: graphsage_forward.1
$region0: #{graphsage_forward.1}
  #allocation0 [shape = 'u32[]', space=smem, size = 0x4, offset = 0x4, fixed_abs, tag = 'smem constant byte address 0x4 - core index']
  #allocation1 [shape = 'u32[144,128]{1,0:T(1,128)}', space=vmem, size = 0x12000, scoped, tag = 'internal scratch']
  %s0 = inlined_call_operand.vmem [shape: bf16[128,128], index: 0, kind: input, shape index: {}]
  %s1 = inlined_call_operand.vmem [shape: f32[1,128], index: 1, kind: input, shape index: {}]
  %s2 = inlined_call_operand.vmem [shape: f32[128,16], index: 2, kind: input, shape index: {}]
  %s3 = inlined_call_operand.vmem [shape: bf16[32,16], index: 3, kind: input, shape index: {}]
  %s4 = inlined_call_operand.vmem [shape: bf16[32,16], index: 4, kind: input, shape index: {}]
  %s5 = inlined_call_operand.vmem [shape: f32[32,1], index: 5, kind: input, shape index: {}]
  %s6 = inlined_call_operand.vmem [shape: bf16[16,32], index: 6, kind: input, shape index: {}]
  %s7 = inlined_call_operand.vmem [shape: f32[8,1], index: 7, kind: input, shape index: {}]
  %s8 = inlined_call_operand.vmem [shape: f32[128,8], index: 8, kind: output, shape index: {}]
  %s9 = sld [smem:[#allocation0]]
  $region42: #{graphsage_forward.1} parent=0
    _
  %s11 = ssub.s32 1, %s9
  %s12 = scalar_select 0, %s11, %s9
  // Predicated region
  $region2: #{graphsage_forward.1} parent=0 // pred_check
    _
  $region3: #{graphsage_forward.1} parent=0 // pred_check_branch
    %14 = sbr.rel (0) target = $region5
  $region4: #{graphsage_forward.1} parent=0 // pred_region
    _
  $region5: #{graphsage_forward.1} parent=0 // pred_fallthru
    _
  // Predicated region
  $region6: #{graphsage_forward.1} parent=0 // pred_check
    _
  $region7: #{graphsage_forward.1} parent=0 // pred_check_branch
    %16 = sbr.rel (0) target = $region9
  $region8: #{graphsage_forward.1} parent=0 // pred_region
    _
  $region9: #{graphsage_forward.1} parent=0 // pred_fallthru
    _
  // Predicated region
  $region10: #{graphsage_forward.1} parent=0 // pred_check
    _
  $region11: #{graphsage_forward.1} parent=0 // pred_check_branch
    %18 = sbr.rel (0) target = $region13
  $region12: #{graphsage_forward.1} parent=0 // pred_region
    _
  $region13: #{graphsage_forward.1} parent=0 // pred_fallthru
    _
  // Predicated region
  $region14: #{graphsage_forward.1} parent=0 // pred_check
    _
  $region15: #{graphsage_forward.1} parent=0 // pred_check_branch
    %20 = sbr.rel (0) target = $region17
  $region16: #{graphsage_forward.1} parent=0 // pred_region
    _
  $region17: #{graphsage_forward.1} parent=0 // pred_fallthru
    _
  // Predicated region
  $region18: #{graphsage_forward.1} parent=0 // pred_check
    _
  $region19: #{graphsage_forward.1} parent=0 // pred_check_branch
    %22 = sbr.rel (0) target = $region21
  $region20: #{graphsage_forward.1} parent=0 // pred_region
    _
  $region21: #{graphsage_forward.1} parent=0 // pred_fallthru
    _
  // Predicated region
  $region22: #{graphsage_forward.1} parent=0 // pred_check
    _
  $region23: #{graphsage_forward.1} parent=0 // pred_check_branch
    %24 = sbr.rel (0) target = $region25
  $region24: #{graphsage_forward.1} parent=0 // pred_region
    _
  $region25: #{graphsage_forward.1} parent=0 // pred_fallthru
    _
  // Predicated region
  $region26: #{graphsage_forward.1} parent=0 // pred_check
    _
  $region27: #{graphsage_forward.1} parent=0 // pred_check_branch
    %26 = sbr.rel (0) target = $region29
  $region28: #{graphsage_forward.1} parent=0 // pred_region
    _
  $region29: #{graphsage_forward.1} parent=0 // pred_fallthru
    _
  // Predicated region
  $region30: #{graphsage_forward.1} parent=0 // pred_check
    _
  $region31: #{graphsage_forward.1} parent=0 // pred_check_branch
    %28 = sbr.rel (0) target = $region33
  $region32: #{graphsage_forward.1} parent=0 // pred_region
    _
  $region33: #{graphsage_forward.1} parent=0 // pred_fallthru
    _
  %v30 = vld [vmem:[%s0] sm:$0xf]
  %v31 = vld [vmem:[%s0 + $0x4] sm:$0xf]
  %v32 = vld [vmem:[%s0 + $0x8] sm:$0xf]
  %v33 = vld [vmem:[%s0 + $0xc] sm:$0xf]
  %v34 = vld [vmem:[%s0 + $0x10] sm:$0xf]
  %v35 = vld [vmem:[%s0 + $0x14] sm:$0xf]
  %v36 = vld [vmem:[%s0 + $0x18] sm:$0xf]
  %v37 = vld [vmem:[%s0 + $0x1c] sm:$0xf]
  %v38 = vld [vmem:[%s0 + $0x20] sm:$0xf]
  %v39 = vld [vmem:[%s0 + $0x24] sm:$0xf]
  %v40 = vld [vmem:[%s0 + $0x28] sm:$0xf]
  %v41 = vld [vmem:[%s0 + $0x2c] sm:$0xf]
  %v42 = vld [vmem:[%s0 + $0x30] sm:$0xf]
  %v43 = vld [vmem:[%s0 + $0x34] sm:$0xf]
  %v44 = vld [vmem:[%s0 + $0x38] sm:$0xf]
  %v45 = vld [vmem:[%s0 + $0x3c] sm:$0xf]
  %v46 = vld [vmem:[%s1] sm:$0x1]
  %v47 = vmax.f32 %v46, 1.0
  %v48 = vrcp.pop %v47
  %v49 = vmul.f32 1.0, %v48
  %v50 = vld [vmem:[%s2] sm:$0xff]
  %v51 = vld [vmem:[%s2 + $0x8] sm:$0xff]
  %v52 = vld [vmem:[%s2 + $0x10] sm:$0xff]
  %v53 = vld [vmem:[%s2 + $0x18] sm:$0xff]
  %v54 = vld [vmem:[%s2 + $0x20] sm:$0xff]
  %v55 = vld [vmem:[%s2 + $0x28] sm:$0xff]
  %v56 = vld [vmem:[%s2 + $0x30] sm:$0xff]
  %v57 = vld [vmem:[%s2 + $0x38] sm:$0xff]
  %v58 = vld [vmem:[%s2 + $0x40] sm:$0xff]
  %v59 = vld [vmem:[%s2 + $0x48] sm:$0xff]
  %v60 = vld [vmem:[%s2 + $0x50] sm:$0xff]
  %v61 = vld [vmem:[%s2 + $0x58] sm:$0xff]
  %v62 = vld [vmem:[%s2 + $0x60] sm:$0xff]
  %v63 = vld [vmem:[%s2 + $0x68] sm:$0xff]
  %v64 = vld [vmem:[%s2 + $0x70] sm:$0xff]
  %v65 = vld [vmem:[%s2 + $0x78] sm:$0xff]
  %66 = vxpose.xlu0.b32.start [1/16] %v50, 128
  %67 = vxpose.xlu0.b32.cont [2/16] %v51, 128
  %68 = vxpose.xlu0.b32.cont [3/16] %v52, 128
  %69 = vxpose.xlu0.b32.cont [4/16] %v53, 128
  %70 = vxpose.xlu0.b32.cont [5/16] %v54, 128
  %71 = vxpose.xlu0.b32.cont [6/16] %v55, 128
  %72 = vxpose.xlu0.b32.cont [7/16] %v56, 128
  %73 = vxpose.xlu0.b32.cont [8/16] %v57, 128
  %74 = vxpose.xlu0.b32.cont [9/16] %v58, 128
  %75 = vxpose.xlu0.b32.cont [10/16] %v59, 128
  %76 = vxpose.xlu0.b32.cont [11/16] %v60, 128
  %77 = vxpose.xlu0.b32.cont [12/16] %v61, 128
  %78 = vxpose.xlu0.b32.cont [13/16] %v62, 128
  %79 = vxpose.xlu0.b32.cont [14/16] %v63, 128
  %80 = vxpose.xlu0.b32.cont [15/16] %v64, 128
  %81 = vxpose.xlu0.b32.end [16/16] %v65, 128
  %v82 = vpop.trf.xlu0
  %v83 = vpop.trf.xlu0
  %v84 = vpop.trf.xlu0
  %v85 = vpop.trf.xlu0
  %v86 = vpop.trf.xlu0
  %v87 = vpop.trf.xlu0
  %v88 = vpop.trf.xlu0
  %v89 = vpop.trf.xlu0
  %v90 = vpop.trf.xlu0
  %v91 = vpop.trf.xlu0
  %v92 = vpop.trf.xlu0
  %v93 = vpop.trf.xlu0
  %v94 = vpop.trf.xlu0
  %v95 = vpop.trf.xlu0
  %v96 = vpop.trf.xlu0
  %v97 = vpop.trf.xlu0
  %v98 = vpack.c.bf16 %v83, %v82
  %v115 = vunpack.c.l.b16 %v30
  %v116 = vunpack.c.l.b16 %v31
  %v117 = vunpack.c.l.b16 %v32
  %v118 = vunpack.c.l.b16 %v33
  %v119 = vunpack.c.l.b16 %v34
  %v120 = vunpack.c.l.b16 %v35
  %v121 = vunpack.c.l.b16 %v36
  %v122 = vunpack.c.l.b16 %v37
  %v123 = vunpack.c.l.b16 %v38
  %v124 = vunpack.c.l.b16 %v39
  %v125 = vunpack.c.l.b16 %v40
  %v126 = vunpack.c.l.b16 %v41
  %v127 = vunpack.c.l.b16 %v42
  %v128 = vunpack.c.l.b16 %v43
  %v129 = vunpack.c.l.b16 %v44
  %v130 = vunpack.c.l.b16 %v45
  %v131 = vpack.c.b16 %v116, %v115
  %v132 = vpack.c.b16 %v118, %v117
  %v133 = vpack.c.b16 %v120, %v119
  %v134 = vpack.c.b16 %v122, %v121
  %v135 = vpack.c.b16 %v124, %v123
  %v136 = vpack.c.b16 %v126, %v125
  %v137 = vpack.c.b16 %v128, %v127
  %v138 = vpack.c.b16 %v130, %v129
  %147 = vmatprep.subr.bf16.mxu0 0
  %148 = vmatpush1.bf16.msra.mxu0 %v131
  %149 = vmatprep.subr.bf16.mxu0 0
  %150 = vmatpush1.bf16.msra.mxu0 %v132
  %151 = vmatprep.subr.bf16.mxu0 0
  %152 = vmatpush1.bf16.msra.mxu0 %v133
  %153 = vmatprep.subr.bf16.mxu0 0
  %154 = vmatpush1.bf16.msra.mxu0 %v134
  %155 = vmatprep.subr.bf16.mxu0 0
  %156 = vmatpush1.bf16.msra.mxu0 %v135
  %157 = vmatprep.subr.bf16.mxu0 0
  %158 = vmatpush1.bf16.msra.mxu0 %v136
  %159 = vmatprep.subr.bf16.mxu0 0
  %160 = vmatpush1.bf16.msra.mxu0 %v137
  %161 = vmatprep.subr.bf16.mxu0 0
  %162 = vmatpush1.bf16.msra.mxu0 %v138
  %163 = vmatprep.subr.bf16.mxu0 0
  %164 = vmatpush1.bf16.msra.mxu0 0
  %165 = vmatprep.subr.bf16.mxu0 0
  %166 = vmatpush1.bf16.msra.mxu0 0
  %167 = vmatprep.subr.bf16.mxu0 0
  %168 = vmatpush1.bf16.msra.mxu0 0
  %169 = vmatprep.subr.bf16.mxu0 0
  %170 = vmatpush1.bf16.msra.mxu0 0
  %171 = vmatprep.subr.bf16.mxu0 0
  %172 = vmatpush1.bf16.msra.mxu0 0
  %173 = vmatprep.subr.bf16.mxu0 0
  %174 = vmatpush1.bf16.msra.mxu0 0
  %175 = vmatprep.subr.bf16.mxu0 0
  %176 = vmatpush1.bf16.msra.mxu0 0
  %177 = vmatprep.subr.bf16.mxu0 0
  %178 = vmatpush1.bf16.msra.mxu0 0
  %179 = vmatprep.mubr.bf16.mxu0 0
  %180 = vmatmul.mubr.bf16.gmra.mrb[0].mxu0 %v98
  %v181 = vpop.f32.mrb[0].mxu0
  %v182 = vadd.f32 0.0, %v181
  %v183 = vpop.f32.mrb[0].mxu0
  %v184 = vpop.f32.mrb[0].mxu0
  %v185 = vadd.f32 0.0, %v184
  %v186 = vpop.f32.mrb[0].mxu0
  %187 = vdwg.mxu0
  %v189 = vlaneseq
  %v190 = vshrl.u32 %v189, 7
  %v191 = vsub.s32 0, %v190
  %v192 = vrot.slane %v49, %v191
  %v194 = vmul.f32 %v182, %v192
  %v195 = vmul.f32 %v185, %v192
  %v196 = vld [vmem:[%s3] sm:$0xf]
  %v197 = vld [vmem:[%s3 + $0x4] sm:$0xf]
  %v198 = vld [vmem:[%s3 + $0x8] sm:$0xf]
  %v199 = vld [vmem:[%s3 + $0xc] sm:$0xf]
  %v200 = vpack.c.bf16 %v195, %v194
  %v201 = vld [vmem:[%s4] sm:$0xf]
  %v202 = vld [vmem:[%s4 + $0x4] sm:$0xf]
  %v203 = vld [vmem:[%s4 + $0x8] sm:$0xf]
  %v204 = vld [vmem:[%s4 + $0xc] sm:$0xf]
  %v209 = vunpack.c.l.b16 %v201
  %v210 = vunpack.c.l.b16 %v202
  %v211 = vunpack.c.l.b16 %v203
  %v212 = vunpack.c.l.b16 %v204
  %v213 = vpack.c.b16 %v210, %v209
  %v214 = vpack.c.b16 %v212, %v211
  %vm215 = vcmask 130048
  %v217 = vsel %vm215, %v213, 0
  %v220 = vsel %vm215, %v214, 0
  %222 = vmatprep.subr.bf16.mxu0 0
  %223 = vmatpush1.bf16.msra.mxu0 %v98
  %224 = vmatprep.subr.bf16.mxu0 0
  %225 = vmatpush1.bf16.msra.mxu0 0
  %226 = vmatprep.subr.bf16.mxu0 0
  %227 = vmatpush1.bf16.msra.mxu0 0
  %228 = vmatprep.subr.bf16.mxu0 0
  %229 = vmatpush1.bf16.msra.mxu0 0
  %230 = vmatprep.subr.bf16.mxu0 0
  %231 = vmatpush1.bf16.msra.mxu0 0
  %232 = vmatprep.subr.bf16.mxu0 0
  %233 = vmatpush1.bf16.msra.mxu0 0
  %234 = vmatprep.subr.bf16.mxu0 0
  %235 = vmatpush1.bf16.msra.mxu0 0
  %236 = vmatprep.subr.bf16.mxu0 0
  %237 = vmatpush1.bf16.msra.mxu0 0
  %238 = vmatprep.subr.bf16.mxu0 0
  %239 = vmatpush1.bf16.msra.mxu0 0
  %240 = vmatprep.subr.bf16.mxu0 0
  %241 = vmatpush1.bf16.msra.mxu0 0
  %242 = vmatprep.subr.bf16.mxu0 0
  %243 = vmatpush1.bf16.msra.mxu0 0
  %244 = vmatprep.subr.bf16.mxu0 0
  %245 = vmatpush1.bf16.msra.mxu0 0
  %246 = vmatprep.subr.bf16.mxu0 0
  %247 = vmatpush1.bf16.msra.mxu0 0
  %248 = vmatprep.subr.bf16.mxu0 0
  %249 = vmatpush1.bf16.msra.mxu0 0
  %250 = vmatprep.subr.bf16.mxu0 0
  %251 = vmatpush1.bf16.msra.mxu0 0
  %252 = vmatprep.subr.bf16.mxu0 0
  %253 = vmatpush1.bf16.msra.mxu0 0
  %254 = vmatprep.mubr.bf16.mxu0 0
  %255 = vmatmul.mubr.bf16.gmra.mrb[0].mxu0 %v217
  %v256 = vpop.f32.mrb[0].mxu0
  %v257 = vadd.f32 0.0, %v256
  %v258 = vpop.f32.mrb[0].mxu0
  %v259 = vpop.f32.mrb[0].mxu0
  %v260 = vadd.f32 0.0, %v259
  %v261 = vpop.f32.mrb[0].mxu0
  %262 = vmatprep.mubr.bf16.mxu0 0
  %263 = vmatmul.mubr.bf16.gmra.mrb[0].mxu0 %v220
  %v264 = vpop.f32.mrb[0].mxu0
  %v265 = vadd.f32 0.0, %v264
  %v266 = vpop.f32.mrb[0].mxu0
  %v267 = vpop.f32.mrb[0].mxu0
  %v268 = vadd.f32 0.0, %v267
  %v269 = vpop.f32.mrb[0].mxu0
  %270 = vdwg.mxu0
  %v275 = vunpack.c.l.b16 %v196
  %v276 = vunpack.c.l.b16 %v197
  %v277 = vunpack.c.l.b16 %v198
  %v278 = vunpack.c.l.b16 %v199
  %v279 = vpack.c.b16 %v276, %v275
  %v280 = vpack.c.b16 %v278, %v277
  %v282 = vsel %vm215, %v279, 0
  %v285 = vsel %vm215, %v280, 0
  %287 = vmatprep.subr.bf16.mxu0 0
  %288 = vmatpush1.bf16.msra.mxu0 %v200
  %289 = vmatprep.subr.bf16.mxu0 0
  %290 = vmatpush1.bf16.msra.mxu0 0
  %291 = vmatprep.subr.bf16.mxu0 0
  %292 = vmatpush1.bf16.msra.mxu0 0
  %293 = vmatprep.subr.bf16.mxu0 0
  %294 = vmatpush1.bf16.msra.mxu0 0
  %295 = vmatprep.subr.bf16.mxu0 0
  %296 = vmatpush1.bf16.msra.mxu0 0
  %297 = vmatprep.subr.bf16.mxu0 0
  %298 = vmatpush1.bf16.msra.mxu0 0
  %299 = vmatprep.subr.bf16.mxu0 0
  %300 = vmatpush1.bf16.msra.mxu0 0
  %301 = vmatprep.subr.bf16.mxu0 0
  %302 = vmatpush1.bf16.msra.mxu0 0
  %303 = vmatprep.subr.bf16.mxu0 0
  %304 = vmatpush1.bf16.msra.mxu0 0
  %305 = vmatprep.subr.bf16.mxu0 0
  %306 = vmatpush1.bf16.msra.mxu0 0
  %307 = vmatprep.subr.bf16.mxu0 0
  %308 = vmatpush1.bf16.msra.mxu0 0
  %309 = vmatprep.subr.bf16.mxu0 0
  %310 = vmatpush1.bf16.msra.mxu0 0
  %311 = vmatprep.subr.bf16.mxu0 0
  %312 = vmatpush1.bf16.msra.mxu0 0
  %313 = vmatprep.subr.bf16.mxu0 0
  %314 = vmatpush1.bf16.msra.mxu0 0
  %315 = vmatprep.subr.bf16.mxu0 0
  %316 = vmatpush1.bf16.msra.mxu0 0
  %317 = vmatprep.subr.bf16.mxu0 0
  %318 = vmatpush1.bf16.msra.mxu0 0
  %319 = vmatprep.mubr.bf16.mxu0 0
  %320 = vmatmul.mubr.bf16.gmra.mrb[0].mxu0 %v282
  %v321 = vpop.f32.mrb[0].mxu0
  %v322 = vadd.f32 %v257, %v321
  %v323 = vpop.f32.mrb[0].mxu0
  %v324 = vpop.f32.mrb[0].mxu0
  %v325 = vadd.f32 %v260, %v324
  %v326 = vpop.f32.mrb[0].mxu0
  %327 = vmatprep.mubr.bf16.mxu0 0
  %328 = vmatmul.mubr.bf16.gmra.mrb[0].mxu0 %v285
  %v329 = vpop.f32.mrb[0].mxu0
  %v330 = vadd.f32 %v265, %v329
  %v331 = vpop.f32.mrb[0].mxu0
  %v332 = vpop.f32.mrb[0].mxu0
  %v333 = vadd.f32 %v268, %v332
  %v334 = vpop.f32.mrb[0].mxu0
  %335 = vdwg.mxu0
  %v336 = vld [vmem:[%s5] sm:$0xff]
  %v337 = vld [vmem:[%s5 + $0x8] sm:$0xff]
  %v338 = vld [vmem:[%s5 + $0x10] sm:$0xff]
  %v339 = vld [vmem:[%s5 + $0x18] sm:$0xff]
  %341 = vset.pattern.permute.xlu0 0
  %342 = vperm.xlu0 %341, %v336
  %v343 = vpop.permute.xlu0 %342
  %346 = vset.pattern.permute.xlu0 0
  %347 = vperm.xlu0 %346, %v337
  %v348 = vpop.permute.xlu0 %347
  %351 = vset.pattern.permute.xlu0 0
  %352 = vperm.xlu0 %351, %v338
  %v353 = vpop.permute.xlu0 %352
  %356 = vset.pattern.permute.xlu0 0
  %357 = vperm.xlu0 %356, %v339
  %v358 = vpop.permute.xlu0 %357
  %v360 = vadd.f32 %v322, %v343
  %v361 = vadd.f32 %v325, %v348
  %v362 = vadd.f32 %v330, %v353
  %v363 = vadd.f32 %v333, %v358
  %v364 = vmax.f32 %v360, 0.0
  %v365 = vmax.f32 %v361, 0.0
  %v366 = vmax.f32 %v362, 0.0
  %v367 = vmax.f32 %v363, 0.0
  %v368 = vld [vmem:[%s6] sm:$0xf]
  %v369 = vld [vmem:[%s6 + $0x4] sm:$0xf]
  %v370 = vpack.c.bf16 %v365, %v364
  %v371 = vpack.c.bf16 %v367, %v366
  %v374 = vunpack.c.l.b16 %v368
  %v375 = vunpack.c.l.b16 %v369
  %v376 = vpack.c.b16 %v375, %v374
  %vm377 = vcmask 261120
  %v379 = vsel %vm377, %v376, 0
  %381 = vmatprep.subr.bf16.mxu0 0
  %382 = vmatpush1.bf16.msra.mxu0 %v370
  %383 = vmatprep.subr.bf16.mxu0 0
  %384 = vmatpush1.bf16.msra.mxu0 %v371
  %385 = vmatprep.subr.bf16.mxu0 0
  %386 = vmatpush1.bf16.msra.mxu0 0
  %387 = vmatprep.subr.bf16.mxu0 0
  %388 = vmatpush1.bf16.msra.mxu0 0
  %389 = vmatprep.subr.bf16.mxu0 0
  %390 = vmatpush1.bf16.msra.mxu0 0
  %391 = vmatprep.subr.bf16.mxu0 0
  %392 = vmatpush1.bf16.msra.mxu0 0
  %393 = vmatprep.subr.bf16.mxu0 0
  %394 = vmatpush1.bf16.msra.mxu0 0
  %395 = vmatprep.subr.bf16.mxu0 0
  %396 = vmatpush1.bf16.msra.mxu0 0
  %397 = vmatprep.subr.bf16.mxu0 0
  %398 = vmatpush1.bf16.msra.mxu0 0
  %399 = vmatprep.subr.bf16.mxu0 0
  %400 = vmatpush1.bf16.msra.mxu0 0
  %401 = vmatprep.subr.bf16.mxu0 0
  %402 = vmatpush1.bf16.msra.mxu0 0
  %403 = vmatprep.subr.bf16.mxu0 0
  %404 = vmatpush1.bf16.msra.mxu0 0
  %405 = vmatprep.subr.bf16.mxu0 0
  %406 = vmatpush1.bf16.msra.mxu0 0
  %407 = vmatprep.subr.bf16.mxu0 0
  %408 = vmatpush1.bf16.msra.mxu0 0
  %409 = vmatprep.subr.bf16.mxu0 0
  %410 = vmatpush1.bf16.msra.mxu0 0
  %411 = vmatprep.subr.bf16.mxu0 0
  %412 = vmatpush1.bf16.msra.mxu0 0
  %413 = vmatprep.mubr.bf16.mxu0 0
  %414 = vmatmul.mubr.bf16.gmra.mrb[0].mxu0 %v379
  %v415 = vpop.f32.mrb[0].mxu0
  %v416 = vadd.f32 0.0, %v415
  %v417 = vpop.f32.mrb[0].mxu0
  %v418 = vpop.f32.mrb[0].mxu0
  %v419 = vadd.f32 0.0, %v418
  %v420 = vpop.f32.mrb[0].mxu0
  %421 = vdwg.mxu0
  %v422 = vpack.c.bf16 %v416, %v416
  %423 = vmatprep.subr.bf16.mxu0 0
  %424 = vmatpush1.bf16.msra.mxu0 %v131
  %425 = vmatprep.subr.bf16.mxu0 0
  %426 = vmatpush1.bf16.msra.mxu0 %v132
  %427 = vmatprep.subr.bf16.mxu0 0
  %428 = vmatpush1.bf16.msra.mxu0 %v133
  %429 = vmatprep.subr.bf16.mxu0 0
  %430 = vmatpush1.bf16.msra.mxu0 %v134
  %431 = vmatprep.subr.bf16.mxu0 0
  %432 = vmatpush1.bf16.msra.mxu0 %v135
  %433 = vmatprep.subr.bf16.mxu0 0
  %434 = vmatpush1.bf16.msra.mxu0 %v136
  %435 = vmatprep.subr.bf16.mxu0 0
  %436 = vmatpush1.bf16.msra.mxu0 %v137
  %437 = vmatprep.subr.bf16.mxu0 0
  %438 = vmatpush1.bf16.msra.mxu0 %v138
  %439 = vmatprep.subr.bf16.mxu0 0
  %440 = vmatpush1.bf16.msra.mxu0 0
  %441 = vmatprep.subr.bf16.mxu0 0
  %442 = vmatpush1.bf16.msra.mxu0 0
  %443 = vmatprep.subr.bf16.mxu0 0
  %444 = vmatpush1.bf16.msra.mxu0 0
  %445 = vmatprep.subr.bf16.mxu0 0
  %446 = vmatpush1.bf16.msra.mxu0 0
  %447 = vmatprep.subr.bf16.mxu0 0
  %448 = vmatpush1.bf16.msra.mxu0 0
  %449 = vmatprep.subr.bf16.mxu0 0
  %450 = vmatpush1.bf16.msra.mxu0 0
  %451 = vmatprep.subr.bf16.mxu0 0
  %452 = vmatpush1.bf16.msra.mxu0 0
  %453 = vmatprep.subr.bf16.mxu0 0
  %454 = vmatpush1.bf16.msra.mxu0 0
  %455 = vmatprep.mubr.bf16.mxu0 0
  %456 = vmatmul.mubr.bf16.gmra.mrb[0].mxu0 %v422
  %v457 = vpop.f32.mrb[0].mxu0
  %v458 = vadd.f32 0.0, %v457
  %v459 = vpop.f32.mrb[0].mxu0
  %v460 = vpop.f32.mrb[0].mxu0
  %v461 = vpop.f32.mrb[0].mxu0
  %462 = vdwg.mxu0
  %v463 = vmul.f32 %v458, %v192
  %v464 = vadd.f32 %v463, %v419
  %v465 = vld [vmem:[%s7] sm:$0xff]
  %467 = vset.pattern.permute.xlu0 0
  %468 = vperm.xlu0 %467, %v465
  %v469 = vpop.permute.xlu0 %468
  %v471 = vadd.f32 %v464, %v469
  %472 = vxpose.xlu0.b32.start [1/16] %v471, 128
  %473 = vxpose.xlu0.b32.cont [2/16] 0.0, 128
  %474 = vxpose.xlu0.b32.cont [3/16] 0.0, 128
  %475 = vxpose.xlu0.b32.cont [4/16] 0.0, 128
  %476 = vxpose.xlu0.b32.cont [5/16] 0.0, 128
  %477 = vxpose.xlu0.b32.cont [6/16] 0.0, 128
  %478 = vxpose.xlu0.b32.cont [7/16] 0.0, 128
  %479 = vxpose.xlu0.b32.cont [8/16] 0.0, 128
  %480 = vxpose.xlu0.b32.cont [9/16] 0.0, 128
  %481 = vxpose.xlu0.b32.cont [10/16] 0.0, 128
  %482 = vxpose.xlu0.b32.cont [11/16] 0.0, 128
  %483 = vxpose.xlu0.b32.cont [12/16] 0.0, 128
  %484 = vxpose.xlu0.b32.cont [13/16] 0.0, 128
  %485 = vxpose.xlu0.b32.cont [14/16] 0.0, 128
  %486 = vxpose.xlu0.b32.cont [15/16] 0.0, 128
  %487 = vxpose.xlu0.b32.end [16/16] 0.0, 128
  %v488 = vpop.trf.xlu0
  %v489 = vpop.trf.xlu0
  %v490 = vpop.trf.xlu0
  %v491 = vpop.trf.xlu0
  %v492 = vpop.trf.xlu0
  %v493 = vpop.trf.xlu0
  %v494 = vpop.trf.xlu0
  %v495 = vpop.trf.xlu0
  %v496 = vpop.trf.xlu0
  %v497 = vpop.trf.xlu0
  %v498 = vpop.trf.xlu0
  %v499 = vpop.trf.xlu0
  %v500 = vpop.trf.xlu0
  %v501 = vpop.trf.xlu0
  %v502 = vpop.trf.xlu0
  %v503 = vpop.trf.xlu0
  %vm504 = vcmask 64512
  %505 = vst.msk [vmem:[%s8] sm:$0xff] %vm504, %v488
  %506 = vst.msk [vmem:[%s8 + $0x8] sm:$0xff] %vm504, %v489
  %507 = vst.msk [vmem:[%s8 + $0x10] sm:$0xff] %vm504, %v490
  %508 = vst.msk [vmem:[%s8 + $0x18] sm:$0xff] %vm504, %v491
  %509 = vst.msk [vmem:[%s8 + $0x20] sm:$0xff] %vm504, %v492
  %510 = vst.msk [vmem:[%s8 + $0x28] sm:$0xff] %vm504, %v493
  %511 = vst.msk [vmem:[%s8 + $0x30] sm:$0xff] %vm504, %v494
  %512 = vst.msk [vmem:[%s8 + $0x38] sm:$0xff] %vm504, %v495
  %513 = vst.msk [vmem:[%s8 + $0x40] sm:$0xff] %vm504, %v496
  %514 = vst.msk [vmem:[%s8 + $0x48] sm:$0xff] %vm504, %v497
  %515 = vst.msk [vmem:[%s8 + $0x50] sm:$0xff] %vm504, %v498
  %516 = vst.msk [vmem:[%s8 + $0x58] sm:$0xff] %vm504, %v499
  %517 = vst.msk [vmem:[%s8 + $0x60] sm:$0xff] %vm504, %v500
  %518 = vst.msk [vmem:[%s8 + $0x68] sm:$0xff] %vm504, %v501
  %519 = vst.msk [vmem:[%s8 + $0x70] sm:$0xff] %vm504, %v502
  %520 = vst.msk [vmem:[%s8 + $0x78] sm:$0xff] %vm504, %v503
  // Predicated region
  $region34: #{graphsage_forward.1} parent=0 // pred_check
    _
  $region35: #{graphsage_forward.1} parent=0 // pred_check_branch
    %522 = sbr.rel (0) target = $region37
  $region36: #{graphsage_forward.1} parent=0 // pred_region
    _
  $region37: #{graphsage_forward.1} parent=0 // pred_fallthru
    _
  // Predicated region
  $region38: #{graphsage_forward.1} parent=0 // pred_check
    _
  $region39: #{graphsage_forward.1} parent=0 // pred_check_branch
    %524 = sbr.rel (0) target = $region41
  $region40: #{graphsage_forward.1} parent=0 // pred_region
    _
  $region41: #{graphsage_forward.1} parent=0 // pred_fallthru
    _

</llo_original>
